<compile_context>
chip_gen: v5e
topology: v5e:2x2
jax: 0.10.0
libtpu: 0.0.40
codegen_flags: <defaults>
</compile_context>

<pallas_src>
import jax
import jax.numpy as jnp
from jax.experimental import pallas as pl
from jax.experimental.pallas import tpu as pltpu

INPUT_SIZE = 4     # CartPole observation size
HIDDEN = 128
ACTION_SIZE = 2    # CartPole action size

_LANE = 128        # lane-dense width for the in-kernel layer-3 result
_OUT_PAD = 8       # columns actually written back to HBM (>= ACTION_SIZE)
_MAX_TB = 2048     # max batch-tile rows per grid step


def _round_up(v, m):
    return (v + m - 1) // m * m


def _mlp_kernel(x_ref, w1_ref, b1_ref, w2_ref, b2_ref, w3_ref, b3_ref, o_ref):
    x = x_ref[...]                                                       # [TB, 4]
    h1 = jnp.dot(x, w1_ref[...], preferred_element_type=jnp.float32)    # [TB, 128]
    h1 = jnp.maximum(h1 + b1_ref[...], 0.0)                             # ReLU
    h2 = jnp.dot(h1, w2_ref[...], preferred_element_type=jnp.float32)   # [TB, 128]
    h2 = jnp.maximum(h2 + b2_ref[...], 0.0)                             # ReLU
    # Lane-dense (128-wide, fully MXU-aligned) result stays in VMEM; only _OUT_PAD
    # columns are written back to HBM.
    out = jnp.dot(h2, w3_ref[...], preferred_element_type=jnp.float32)  # [TB, 128]
    o_ref[...] = (out[:, : o_ref.shape[1]] + b3_ref[...]).astype(o_ref.dtype)


def prepare_params(w1, b1, w2, b2, w3, b3):
    """One-time last-layer padding (hoisted out of the jitted forward)."""
    out_cols = w3.shape[1]
    assert out_cols <= _OUT_PAD <= _LANE
    w3_p = jnp.pad(w3, ((0, 0), (0, _LANE - out_cols)))      # [128, 128], zero cols
    b3_p = jnp.pad(b3, ((0, 0), (0, _OUT_PAD - out_cols)))   # [1, 8], zero cols
    return w1, b1, w2, b2, w3_p, b3_p


def n_network_forward(x, w1, b1, w2, b2, w3_p, b3_p):
    """Fused forward: relu(relu(x@w1+b1)@w2+b2)@w3+b3 -> [B, ACTION_SIZE].

    Expects the padded last-layer params produced by prepare_params().
    """
    B, F = x.shape
    assert w1.shape == (F, HIDDEN) and w2.shape == (HIDDEN, HIDDEN)
    assert w3_p.shape == (HIDDEN, _LANE) and b3_p.shape == (1, _OUT_PAD)

    # Batch tiling.  For B > 16 force >= 2 grid steps so the "parallel" batch axis can
    # shard across both TensorCores on v7x (no-op on v5e/v6e); weights stay resident.
    if B <= 16:
        tb = _round_up(B, 8)
    else:
        tb = min(_MAX_TB, _round_up(-(-B // 2), 8))
    b_pad = _round_up(B, tb)
    x_p = jnp.pad(x, ((0, b_pad - B), (0, 0))) if b_pad != B else x
    grid = (b_pad // tb,)

    resident = lambda shape: pl.BlockSpec(shape, lambda i: (0, 0))

    out_p = pl.pallas_call(
        _mlp_kernel,
        out_shape=jax.ShapeDtypeStruct((b_pad, _OUT_PAD), jnp.float32),
        grid=grid,
        in_specs=[
            pl.BlockSpec((tb, F), lambda i: (i, 0)),     # x: tiled over the batch
            resident(w1.shape), resident(b1.shape),      # params: resident in VMEM
            resident(w2.shape), resident(b2.shape),
            resident(w3_p.shape), resident(b3_p.shape),
        ],
        out_specs=pl.BlockSpec((tb, _OUT_PAD), lambda i: (i, 0)),
        compiler_params=pltpu.CompilerParams(
            dimension_semantics=("parallel",),
        ),
    )(x_p, w1, b1, w2, b2, w3_p, b3_p)

    return out_p[:B, :ACTION_SIZE]


def init_params(key):
    """Deterministic init mimicking PyTorch Linear default (uniform +/- 1/sqrt(fan_in))."""
    def linear(k, fan_in, fan_out):
        kw, kb = jax.random.split(k)
        bound = 1.0 / jnp.sqrt(jnp.float32(fan_in))
        w = jax.random.uniform(kw, (fan_in, fan_out), jnp.float32, -bound, bound)
        b = jax.random.uniform(kb, (1, fan_out), jnp.float32, -bound, bound)
        return w, b

    k1, k2, k3 = jax.random.split(key, 3)
    w1, b1 = linear(k1, INPUT_SIZE, HIDDEN)
    w2, b2 = linear(k2, HIDDEN, HIDDEN)
    w3, b3 = linear(k3, HIDDEN, ACTION_SIZE)
    return w1, b1, w2, b2, w3, b3


def _reference(x, w1, b1, w2, b2, w3, b3):
    # HIGHEST precision so the reference matches the kernel's true-f32 MXU matmuls.
    hp = jax.lax.Precision.HIGHEST
    h = jnp.maximum(jnp.dot(x, w1, precision=hp) + b1, 0.0)
    h = jnp.maximum(jnp.dot(h, w2, precision=hp) + b2, 0.0)
    return jnp.dot(h, w3, precision=hp) + b3


if __name__ == "__main__":
    key = jax.random.PRNGKey(0)
    k_params, k_x1, k_x2 = jax.random.split(key, 3)

    raw_params = init_params(k_params)
    padded_params = prepare_params(*raw_params)     # one-time padding, outside jit
    fwd = jax.jit(n_network_forward)

    # Small single-step case (B=8) and a multi-step / row-padded case (B=40, grid=(2,)).
    for k_x, batch in ((k_x1, 8), (k_x2, 40)):
        x = jax.random.normal(k_x, (batch, INPUT_SIZE), jnp.float32)
        out = jax.block_until_ready(fwd(x, *padded_params))
        ref = _reference(x, *raw_params)
        assert out.shape == (batch, ACTION_SIZE)
        assert jnp.allclose(out, ref, atol=1e-4, rtol=1e-4)

    print("KERNEL_OK")
</pallas_src>

<mosaic_0001>
module attributes {stable_mosaic.version = 11 : i64} {
  func.func @_mlp_kernel(%arg0: i32, %arg1: memref<8x4xf32, #tpu.memory_space<vmem>>, %arg2: memref<4x128xf32, #tpu.memory_space<vmem>>, %arg3: memref<1x128xf32, #tpu.memory_space<vmem>>, %arg4: memref<128x128xf32, #tpu.memory_space<vmem>>, %arg5: memref<1x128xf32, #tpu.memory_space<vmem>>, %arg6: memref<128x128xf32, #tpu.memory_space<vmem>>, %arg7: memref<1x8xf32, #tpu.memory_space<vmem>>, %arg8: memref<8x8xf32, #tpu.memory_space<vmem>>) attributes {dimension_semantics = [#tpu.dimension_semantics<parallel>], iteration_bounds = array<i64: 1>, scalar_prefetch = 0 : i64, scratch_operands = 0 : i64, tpu.core_type = #tpu.core_type<tc>, window_params = [{transform_indices = @transform_0, window_bounds = array<i64: 8, 4>}, {pipeline_mode = #tpu.pipeline_mode<synchronous>, transform_indices = @transform_1, window_bounds = array<i64: 4, 128>}, {pipeline_mode = #tpu.pipeline_mode<synchronous>, transform_indices = @transform_2, window_bounds = array<i64: 1, 128>}, {pipeline_mode = #tpu.pipeline_mode<synchronous>, transform_indices = @transform_3, window_bounds = array<i64: 128, 128>}, {pipeline_mode = #tpu.pipeline_mode<synchronous>, transform_indices = @transform_4, window_bounds = array<i64: 1, 128>}, {pipeline_mode = #tpu.pipeline_mode<synchronous>, transform_indices = @transform_5, window_bounds = array<i64: 128, 128>}, {pipeline_mode = #tpu.pipeline_mode<synchronous>, transform_indices = @transform_6, window_bounds = array<i64: 1, 8>}, {transform_indices = @transform_7, window_bounds = array<i64: 8, 8>}]} {
    %c0 = arith.constant 0 : index
    %c0_0 = arith.constant 0 : index
    %0 = vector.load %arg1[%c0, %c0_0] : memref<8x4xf32, #tpu.memory_space<vmem>>, vector<8x4xf32>
    %c0_1 = arith.constant 0 : index
    %c0_2 = arith.constant 0 : index
    %1 = vector.load %arg2[%c0_1, %c0_2] : memref<4x128xf32, #tpu.memory_space<vmem>>, vector<4x128xf32>
    %cst = arith.constant dense<0.000000e+00> : vector<8x128xf32>
    %2 = tpu.matmul %0, %1, %cst {dimension_numbers = #tpu.dot_dimension_numbers<[1], [0], [0], [1], [0, 0, 1, 1], [], []>} : vector<8x4xf32>, vector<4x128xf32>, vector<8x128xf32> -> vector<8x128xf32>
    %c0_3 = arith.constant 0 : index
    %c0_4 = arith.constant 0 : index
    %3 = vector.load %arg3[%c0_3, %c0_4] : memref<1x128xf32, #tpu.memory_space<vmem>>, vector<1x128xf32>
    %4 = vector.broadcast %3 : vector<1x128xf32> to vector<8x128xf32>
    %5 = arith.addf %2, %4 : vector<8x128xf32>
    %cst_5 = arith.constant 0.000000e+00 : f32
    %6 = vector.broadcast %cst_5 : f32 to vector<8x128xf32>
    %7 = arith.maximumf %5, %6 : vector<8x128xf32>
    %c0_6 = arith.constant 0 : index
    %c0_7 = arith.constant 0 : index
    %8 = vector.load %arg4[%c0_6, %c0_7] : memref<128x128xf32, #tpu.memory_space<vmem>>, vector<128x128xf32>
    %cst_8 = arith.constant dense<0.000000e+00> : vector<8x128xf32>
    %9 = tpu.matmul %7, %8, %cst_8 {dimension_numbers = #tpu.dot_dimension_numbers<[1], [0], [0], [1], [0, 0, 1, 1], [], []>} : vector<8x128xf32>, vector<128x128xf32>, vector<8x128xf32> -> vector<8x128xf32>
    %c0_9 = arith.constant 0 : index
    %c0_10 = arith.constant 0 : index
    %10 = vector.load %arg5[%c0_9, %c0_10] : memref<1x128xf32, #tpu.memory_space<vmem>>, vector<1x128xf32>
    %11 = vector.broadcast %10 : vector<1x128xf32> to vector<8x128xf32>
    %12 = arith.addf %9, %11 : vector<8x128xf32>
    %cst_11 = arith.constant 0.000000e+00 : f32
    %13 = vector.broadcast %cst_11 : f32 to vector<8x128xf32>
    %14 = arith.maximumf %12, %13 : vector<8x128xf32>
    %c0_12 = arith.constant 0 : index
    %c0_13 = arith.constant 0 : index
    %15 = vector.load %arg6[%c0_12, %c0_13] : memref<128x128xf32, #tpu.memory_space<vmem>>, vector<128x128xf32>
    %cst_14 = arith.constant dense<0.000000e+00> : vector<8x128xf32>
    %16 = tpu.matmul %14, %15, %cst_14 {dimension_numbers = #tpu.dot_dimension_numbers<[1], [0], [0], [1], [0, 0, 1, 1], [], []>} : vector<8x128xf32>, vector<128x128xf32>, vector<8x128xf32> -> vector<8x128xf32>
    %17 = vector.extract_strided_slice %16 {offsets = [0, 0], sizes = [8, 8], strides = [1, 1]} : vector<8x128xf32> to vector<8x8xf32>
    %c0_15 = arith.constant 0 : index
    %c0_16 = arith.constant 0 : index
    %18 = vector.load %arg7[%c0_15, %c0_16] : memref<1x8xf32, #tpu.memory_space<vmem>>, vector<1x8xf32>
    %19 = vector.broadcast %18 : vector<1x8xf32> to vector<8x8xf32>
    %20 = arith.addf %17, %19 : vector<8x8xf32>
    %c0_17 = arith.constant 0 : index
    %c0_18 = arith.constant 0 : index
    %21 = vector.load %arg8[%c0_17, %c0_18] : memref<8x8xf32, #tpu.memory_space<vmem>>, vector<8x8xf32>
    tpu.vector_store %arg8[%c0_17, %c0_18], %20 {strides = array<i32>} : memref<8x8xf32, #tpu.memory_space<vmem>>, vector<8x8xf32>,
    return
  }
  func.func @transform_0(%arg0: i32) -> (i32, i32) {
    %c0_i32 = arith.constant 0 : i32
    %c0_i32_0 = arith.constant 0 : i32
    return %arg0, %c0_i32 : i32, i32
  }
  func.func @transform_1(%arg0: i32) -> (i32, i32) {
    %c0_i32 = arith.constant 0 : i32
    %c0_i32_0 = arith.constant 0 : i32
    %c0_i32_1 = arith.constant 0 : i32
    return %c0_i32, %c0_i32_0 : i32, i32
  }
  func.func @transform_2(%arg0: i32) -> (i32, i32) {
    %c0_i32 = arith.constant 0 : i32
    %c0_i32_0 = arith.constant 0 : i32
    %c0_i32_1 = arith.constant 0 : i32
    return %c0_i32, %c0_i32_0 : i32, i32
  }
  func.func @transform_3(%arg0: i32) -> (i32, i32) {
    %c0_i32 = arith.constant 0 : i32
    %c0_i32_0 = arith.constant 0 : i32
    %c0_i32_1 = arith.constant 0 : i32
    return %c0_i32, %c0_i32_0 : i32, i32
  }
  func.func @transform_4(%arg0: i32) -> (i32, i32) {
    %c0_i32 = arith.constant 0 : i32
    %c0_i32_0 = arith.constant 0 : i32
    %c0_i32_1 = arith.constant 0 : i32
    return %c0_i32, %c0_i32_0 : i32, i32
  }
  func.func @transform_5(%arg0: i32) -> (i32, i32) {
    %c0_i32 = arith.constant 0 : i32
    %c0_i32_0 = arith.constant 0 : i32
    %c0_i32_1 = arith.constant 0 : i32
    return %c0_i32, %c0_i32_0 : i32, i32
  }
  func.func @transform_6(%arg0: i32) -> (i32, i32) {
    %c0_i32 = arith.constant 0 : i32
    %c0_i32_0 = arith.constant 0 : i32
    %c0_i32_1 = arith.constant 0 : i32
    return %c0_i32, %c0_i32_0 : i32, i32
  }
  func.func @transform_7(%arg0: i32) -> (i32, i32) {
    %c0_i32 = arith.constant 0 : i32
    %c0_i32_0 = arith.constant 0 : i32
    return %arg0, %c0_i32 : i32, i32
  }
}

</mosaic_0001>

<llo_original>
// kernel: n_network_forward.1
$region0: #{n_network_forward.1}
  #allocation0 [shape = 'u32[]', space=smem, size = 0x4, offset = 0x4, fixed_abs, tag = 'smem constant byte address 0x4 - core index']
  #allocation1 [shape = 'u32[72,128]{1,0:T(1,128)}', space=vmem, size = 0x9000, scoped, tag = 'internal scratch']
  %s0 = inlined_call_operand.vmem [shape: f32[8,4], index: 0, kind: input, shape index: {}]
  %s1 = inlined_call_operand.vmem [shape: f32[4,128], index: 1, kind: input, shape index: {}]
  %s2 = inlined_call_operand.vmem [shape: f32[1,128], index: 2, kind: input, shape index: {}]
  %s3 = inlined_call_operand.hbm [shape: f32[128,128], index: 3, kind: input, shape index: {}]
  %s4 = inlined_call_operand.vmem [shape: f32[1,128], index: 4, kind: input, shape index: {}]
  %s5 = inlined_call_operand.hbm [shape: f32[128,128], index: 5, kind: input, shape index: {}]
  %s6 = inlined_call_operand.vmem [shape: f32[1,8], index: 6, kind: input, shape index: {}]
  %s7 = inlined_call_operand.vmem [shape: f32[8,8], index: 7, kind: output, shape index: {}]
  %s8 = sld [smem:[#allocation0]]
  $region46: #{n_network_forward.1} parent=0
    _
  %s10 = ssub.s32 1, %s8
  %s11 = scalar_select 0, %s10, %s8
  $region1: #{n_network_forward.1} parent=0
    #allocation2 [shape = 'u8[65536]{0}', space=vmem, size = 0x10000, scoped, tag = 'input window, operand 3, single buffered']
    #allocation3 [shape = 's32[1]{0}', space=sflag, size = 0x4, scoped, tag = 'scoped memory for n_network_forward.1']
    #allocation4 [shape = 'u8[65536]{0}', space=vmem, size = 0x10000, scoped, tag = 'input window, operand 5, single buffered']
    #allocation5 [shape = 's32[1]{0}', space=sflag, size = 0x4, scoped, tag = 'scoped memory for n_network_forward.1']
    %12 = vsyncpa [#allocation3], 0
    %13 = vsyncpa [#allocation5], 0
    // Predicated region
    $region2: #{n_network_forward.1} parent=1 // pred_check
      _
    $region3: #{n_network_forward.1} parent=1 // pred_check_branch
      %15 = sbr.rel (0) target = $region5
    $region4: #{n_network_forward.1} parent=1 // pred_region
      _
    $region5: #{n_network_forward.1} parent=1 // pred_fallthru
      _
    // Predicated region
    $region6: #{n_network_forward.1} parent=1 // pred_check
      _
    $region7: #{n_network_forward.1} parent=1 // pred_check_branch
      %17 = sbr.rel (0) target = $region9
    $region8: #{n_network_forward.1} parent=1 // pred_region
      _
    $region9: #{n_network_forward.1} parent=1 // pred_fallthru
      _
    // Predicated region
    $region10: #{n_network_forward.1} parent=1 // pred_check
      _
    $region11: #{n_network_forward.1} parent=1 // pred_check_branch
      %19 = sbr.rel (0) target = $region13
    $region12: #{n_network_forward.1} parent=1 // pred_region
      _
    $region13: #{n_network_forward.1} parent=1 // pred_fallthru
      _
    // Predicated region
    $region14: #{n_network_forward.1} parent=1 // pred_check
      _
    $region15: #{n_network_forward.1} parent=1 // pred_check_branch
      %21 = sbr.rel (0) target = $region17
    $region16: #{n_network_forward.1} parent=1 // pred_region
      %23 = vsyncadd [#allocation3], 0
      %s24 = sshll.u32 %s3, 4
      %s25 = int_to_ptr.hbm [resolvable:$true] %s24
      %s26 = sshll.u32 [#allocation2], 4
      %s27 = int_to_ptr.vmem [resolvable:$true] %s26
      %32 = dma.hbm_to_vmem [thread:$0]  %s25, 2048, %s27, [#allocation3], 128, 128, 8
    $region17: #{n_network_forward.1} parent=1 // pred_fallthru
      _
    // Predicated region
    $region18: #{n_network_forward.1} parent=1 // pred_check
      _
    $region19: #{n_network_forward.1} parent=1 // pred_check_branch
      %34 = sbr.rel (0) target = $region21
    $region20: #{n_network_forward.1} parent=1 // pred_region
      _
    $region21: #{n_network_forward.1} parent=1 // pred_fallthru
      _
    // Predicated region
    $region22: #{n_network_forward.1} parent=1 // pred_check
      _
    $region23: #{n_network_forward.1} parent=1 // pred_check_branch
      %36 = sbr.rel (0) target = $region25
    $region24: #{n_network_forward.1} parent=1 // pred_region
      %38 = vsyncadd [#allocation5], 0
      %s39 = sshll.u32 %s5, 4
      %s40 = int_to_ptr.hbm [resolvable:$true] %s39
      %s41 = sshll.u32 [#allocation4], 4
      %s42 = int_to_ptr.vmem [resolvable:$true] %s41
      %47 = dma.hbm_to_vmem [thread:$0]  %s40, 2048, %s42, [#allocation5], 128, 128, 8
    $region25: #{n_network_forward.1} parent=1 // pred_fallthru
      _
    // Predicated region
    $region26: #{n_network_forward.1} parent=1 // pred_check
      _
    $region27: #{n_network_forward.1} parent=1 // pred_check_branch
      %49 = sbr.rel (0) target = $region29
    $region28: #{n_network_forward.1} parent=1 // pred_region
      _
    $region29: #{n_network_forward.1} parent=1 // pred_fallthru
      _
    // Predicated region
    $region30: #{n_network_forward.1} parent=1 // pred_check
      _
    $region31: #{n_network_forward.1} parent=1 // pred_check_branch
      %51 = sbr.rel (0) target = $region33
    $region32: #{n_network_forward.1} parent=1 // pred_region
      %53 = dma.done [#allocation3], 2048
    $region33: #{n_network_forward.1} parent=1 // pred_fallthru
      _
    // Predicated region
    $region34: #{n_network_forward.1} parent=1 // pred_check
      _
    $region35: #{n_network_forward.1} parent=1 // pred_check_branch
      %55 = sbr.rel (0) target = $region37
    $region36: #{n_network_forward.1} parent=1 // pred_region
      %57 = dma.done [#allocation5], 2048
    $region37: #{n_network_forward.1} parent=1 // pred_fallthru
      _
    %v58 = vld [vmem:[%s0] sm:$0xff]
    %v59 = vld [vmem:[%s1] sm:$0xf]
    %v60 = vld [vmem:[%s2] sm:$0x1]
    %v62 = vperm.slane %v60, 0
    %vm64 = vcmask 31744
    %v66 = vsel %vm64, %v58, 0
    %vm68 = vcmask 1043456
    %v70 = vsel %vm68, %v59, 0
    %72 = vmatpush.msra.mxu0 0.0
    %73 = vmatpush.msra.mxu0 0.0
    %74 = vmatpush.msra.mxu0 0.0
    %75 = vmatpush.msra.mxu0 0.0
    %76 = vmatpush.msra.mxu0 0.0
    %77 = vmatpush.msra.mxu0 0.0
    %78 = vmatpush.msra.mxu0 0.0
    %79 = vmatpush.msra.mxu0 0.0
    %80 = vmatpush.msra.mxu0 0.0
    %81 = vmatpush.msra.mxu0 0.0
    %82 = vmatpush.msra.mxu0 0.0
    %83 = vmatpush.msra.mxu0 0.0
    %84 = vmatpush.msra.mxu0 0.0
    %85 = vmatpush.msra.mxu0 0.0
    %86 = vmatpush.msra.mxu0 0.0
    %87 = vmatpush.msra.mxu0 %v70
    %88 = vmatmul.f32.gmra.mxu0 %v66
    %v89 = vpop.f32.mrf.mxu0
    %v90 = vadd.f32 %v62, %v89
    %91 = vdwg.mxu0
    %v92 = vmax.f32 %v90, 0.0
    %v93 = vld [vmem:[#allocation2] sm:$0xff]
    %v94 = vld [vmem:[#allocation2 + $0x8] sm:$0xff]
    %v95 = vld [vmem:[#allocation2 + $0x10] sm:$0xff]
    %v96 = vld [vmem:[#allocation2 + $0x18] sm:$0xff]
    %v97 = vld [vmem:[#allocation2 + $0x20] sm:$0xff]
    %v98 = vld [vmem:[#allocation2 + $0x28] sm:$0xff]
    %v99 = vld [vmem:[#allocation2 + $0x30] sm:$0xff]
    %v100 = vld [vmem:[#allocation2 + $0x38] sm:$0xff]
    %v101 = vld [vmem:[#allocation2 + $0x40] sm:$0xff]
    %v102 = vld [vmem:[#allocation2 + $0x48] sm:$0xff]
    %v103 = vld [vmem:[#allocation2 + $0x50] sm:$0xff]
    %v104 = vld [vmem:[#allocation2 + $0x58] sm:$0xff]
    %v105 = vld [vmem:[#allocation2 + $0x60] sm:$0xff]
    %v106 = vld [vmem:[#allocation2 + $0x68] sm:$0xff]
    %v107 = vld [vmem:[#allocation2 + $0x70] sm:$0xff]
    %v108 = vld [vmem:[#allocation2 + $0x78] sm:$0xff]
    %v109 = vld [vmem:[%s4] sm:$0x1]
    %v111 = vperm.slane %v109, 0
    %113 = vmatpush.msra.mxu0 %v108
    %114 = vmatpush.msra.mxu0 %v107
    %115 = vmatpush.msra.mxu0 %v106
    %116 = vmatpush.msra.mxu0 %v105
    %117 = vmatpush.msra.mxu0 %v104
    %118 = vmatpush.msra.mxu0 %v103
    %119 = vmatpush.msra.mxu0 %v102
    %120 = vmatpush.msra.mxu0 %v101
    %121 = vmatpush.msra.mxu0 %v100
    %122 = vmatpush.msra.mxu0 %v99
    %123 = vmatpush.msra.mxu0 %v98
    %124 = vmatpush.msra.mxu0 %v97
    %125 = vmatpush.msra.mxu0 %v96
    %126 = vmatpush.msra.mxu0 %v95
    %127 = vmatpush.msra.mxu0 %v94
    %128 = vmatpush.msra.mxu0 %v93
    %129 = vmatmul.f32.gmra.mxu0 %v92
    %v130 = vpop.f32.mrf.mxu0
    %v131 = vadd.f32 %v111, %v130
    %132 = vdwg.mxu0
    %v133 = vmax.f32 %v131, 0.0
    %v134 = vld [vmem:[#allocation4] sm:$0xff]
    %v135 = vld [vmem:[#allocation4 + $0x8] sm:$0xff]
    %v136 = vld [vmem:[#allocation4 + $0x10] sm:$0xff]
    %v137 = vld [vmem:[#allocation4 + $0x18] sm:$0xff]
    %v138 = vld [vmem:[#allocation4 + $0x20] sm:$0xff]
    %v139 = vld [vmem:[#allocation4 + $0x28] sm:$0xff]
    %v140 = vld [vmem:[#allocation4 + $0x30] sm:$0xff]
    %v141 = vld [vmem:[#allocation4 + $0x38] sm:$0xff]
    %v142 = vld [vmem:[#allocation4 + $0x40] sm:$0xff]
    %v143 = vld [vmem:[#allocation4 + $0x48] sm:$0xff]
    %v144 = vld [vmem:[#allocation4 + $0x50] sm:$0xff]
    %v145 = vld [vmem:[#allocation4 + $0x58] sm:$0xff]
    %v146 = vld [vmem:[#allocation4 + $0x60] sm:$0xff]
    %v147 = vld [vmem:[#allocation4 + $0x68] sm:$0xff]
    %v148 = vld [vmem:[#allocation4 + $0x70] sm:$0xff]
    %v149 = vld [vmem:[#allocation4 + $0x78] sm:$0xff]
    %150 = vmatpush.msra.mxu0 %v149
    %151 = vmatpush.msra.mxu0 %v148
    %152 = vmatpush.msra.mxu0 %v147
    %153 = vmatpush.msra.mxu0 %v146
    %154 = vmatpush.msra.mxu0 %v145
    %155 = vmatpush.msra.mxu0 %v144
    %156 = vmatpush.msra.mxu0 %v143
    %157 = vmatpush.msra.mxu0 %v142
    %158 = vmatpush.msra.mxu0 %v141
    %159 = vmatpush.msra.mxu0 %v140
    %160 = vmatpush.msra.mxu0 %v139
    %161 = vmatpush.msra.mxu0 %v138
    %162 = vmatpush.msra.mxu0 %v137
    %163 = vmatpush.msra.mxu0 %v136
    %164 = vmatpush.msra.mxu0 %v135
    %165 = vmatpush.msra.mxu0 %v134
    %166 = vmatmul.f32.gmra.mxu0 %v133
    %v167 = vpop.f32.mrf.mxu0
    %v168 = vadd.f32 0.0, %v167
    %169 = vdwg.mxu0
    %v170 = vld [vmem:[%s6] sm:$0x1]
    %v172 = vperm.slane %v170, 0
    %v174 = vadd.f32 %v168, %v172
    %vm175 = vcmask 64512
    %176 = vst.msk [vmem:[%s7] sm:$0xff] %vm175, %v174
    // Predicated region
    $region38: #{n_network_forward.1} parent=1 // pred_check
      _
    $region39: #{n_network_forward.1} parent=1 // pred_check_branch
      %178 = sbr.rel (0) target = $region41
    $region40: #{n_network_forward.1} parent=1 // pred_region
      _
    $region41: #{n_network_forward.1} parent=1 // pred_fallthru
      _
    // Predicated region
    $region42: #{n_network_forward.1} parent=1 // pred_check
      _
    $region43: #{n_network_forward.1} parent=1 // pred_check_branch
      %180 = sbr.rel (0) target = $region45
    $region44: #{n_network_forward.1} parent=1 // pred_region
      _
    $region45: #{n_network_forward.1} parent=1 // pred_fallthru
      _
    %181 = vsyncpa [#allocation3], 1
    %182 = vsyncpa [#allocation5], 1

</llo_original>
